<compile_context>
chip_gen: v7x
topology: tpu7x:2x2x1
jax: 0.10.0
libtpu: 0.0.40
codegen_flags: <defaults>
</compile_context>

<pallas_src>
import jax
import jax.numpy as jnp
from jax.experimental import pallas as pl
from jax.experimental.pallas import tpu as pltpu


def _leaky_relu(x, slope=0.01):
    # torch.nn.LeakyReLU default negative_slope = 0.01
    return jnp.where(x > 0, x, slope * x)


def _dot(a, w):
    # Cast activations to the weight compute dtype (no-op for f32, enables the
    # bf16 MXU path when weights / x_sur are bf16); accumulate in f32.
    return jnp.dot(a.astype(w.dtype), w, preferred_element_type=jnp.float32)


def _make_kernel(TB, S, F, main_channel):
    def kernel(xsur_ref, pre_ref, w_in_ref, b_ref, w_mid_ref, w_o2_ref,
               out_ref):
        # (TB, S, F) -> (TB*S, F): tall B*S rows become the matmul M dim.
        # Layout-preserving merge when S % 8 == 0 (demo uses S=8).
        xs = xsur_ref[...].reshape(TB * S, F)

        # Stacked biases: row 0 = in, 1 = tune1, 2 = tune2, 3 = out1 (all f32).
        b_in = b_ref[0:1, :]
        b_t1 = b_ref[1:2, :]
        b_t2 = b_ref[2:3, :]
        b_o1 = b_ref[3:4, :]

        # mlp_in: Linear(F_padded -> mc) + LeakyReLU.  Rows [n_class:F] of w_in
        # are zero, so this is bit-identical to slicing x_sur[:, :, :n_class].
        h = _leaky_relu(_dot(xs, w_in_ref[...]) + b_in)

        # mlp_tune: 2 x (Linear(mc -> mc) + LeakyReLU), epilogue stays f32.
        h = _leaky_relu(_dot(h, w_mid_ref[0]) + b_t1)
        h = _leaky_relu(_dot(h, w_mid_ref[1]) + b_t2)

        # mean over the neighbour axis S (sublane reduce -> XLU), residual add.
        tmp = jnp.mean(h.reshape(TB, S, main_channel), axis=1) + pre_ref[...]

        # mlp_out: Linear + LeakyReLU, then Linear (no bias).  w_o2 is padded to
        # a lane-dense 128-multiple so the output store is unmasked.
        t = _leaky_relu(_dot(tmp, w_mid_ref[2]) + b_o1)
        out_ref[...] = _dot(t, w_o2_ref[...]).astype(out_ref.dtype)

    return kernel


def v2p_finetuner_forward(x, x_sur, params, *, n_class, main_channel,
                          out_channels, batch_tile=8, use_bf16=False,
                          vmem_limit_bytes=None):
    """Forward pass.  batch_tile must be a multiple of 8; at real sizes pick it
    so that batch_tile * S >= ~256 rows, keeping
    2 buffers x (TB*S*F*itemsize) well under the scoped VMEM limit."""
    B = x.shape[0]
    _, S, F = x_sur.shape
    assert F >= n_class
    assert batch_tile % 8 == 0
    assert x.shape[1] >= n_class + main_channel

    # Weights are stored (in, out) -- transposed vs. torch.  Guard shapes.
    assert params["w_in"].shape == (n_class, main_channel)
    assert params["w_t1"].shape == (main_channel, main_channel)
    assert params["w_t2"].shape == (main_channel, main_channel)
    assert params["w_o1"].shape == (main_channel, main_channel)
    assert params["w_o2"].shape == (main_channel, out_channels)

    # ---- wrapper-side preprocessing (fused into XLA, free at kernel level) --
    pre = x[:, n_class:n_class + main_channel].astype(jnp.float32)

    # Zero-pad w_in over rows [n_class:F] -> contract full F inside the kernel.
    w_in = jnp.zeros((F, main_channel), params["w_in"].dtype)
    w_in = w_in.at[:n_class, :].set(params["w_in"])

    # Zero-pad final projection columns to a lane-dense width (multiple of 128).
    out_pad = ((max(out_channels, 1) + 127) // 128) * 128
    w_o2 = jnp.zeros((main_channel, out_pad), params["w_o2"].dtype)
    w_o2 = w_o2.at[:, :out_channels].set(params["w_o2"])

    # Stack the three (mc, mc) hidden weights into one slab: [t1, t2, o1].
    w_mid = jnp.stack([params["w_t1"], params["w_t2"], params["w_o1"]], axis=0)

    if use_bf16:
        # Halve HBM bytes of the dominant x_sur stream and double MXU rate on
        # v6e/v7x; accumulation stays f32 (preferred_element_type), bias adds
        # and the epilogue stay f32.
        cdt = jnp.bfloat16
        x_sur = x_sur.astype(cdt)
        w_in = w_in.astype(cdt)
        w_mid = w_mid.astype(cdt)
        w_o2 = w_o2.astype(cdt)
    else:
        x_sur = x_sur.astype(jnp.float32)

    # Stack biases into one (4, mc) f32 tile: [in, t1, t2, o1].
    b_all = jnp.concatenate(
        [params["b_in"], params["b_t1"], params["b_t2"], params["b_o1"]],
        axis=0).astype(jnp.float32)

    # ---- batch tiling: grid over B, weights VMEM-resident -------------------
    TB = min(batch_tile, B)
    B_pad = pl.cdiv(B, TB) * TB
    if B_pad != B:
        pre = jnp.pad(pre, ((0, B_pad - B), (0, 0)))
        x_sur = jnp.pad(x_sur, ((0, B_pad - B), (0, 0), (0, 0)))

    kernel = _make_kernel(TB, S, F, main_channel)
    const2 = lambda i: (0, 0)     # 2-D weight/bias tiles: same block every step
    const3 = lambda i: (0, 0, 0)  # stacked 3-D weight slab

    compiler_params = pltpu.CompilerParams(
        dimension_semantics=("parallel",),
        vmem_limit_bytes=vmem_limit_bytes,
    )

    out = pl.pallas_call(
        kernel,
        out_shape=jax.ShapeDtypeStruct((B_pad, out_pad), jnp.float32),
        grid_spec=pltpu.PrefetchScalarGridSpec(
            num_scalar_prefetch=0,
            grid=(B_pad // TB,),
            in_specs=[
                pl.BlockSpec((TB, S, F), lambda i: (i, 0, 0)),             # x_sur
                pl.BlockSpec((TB, main_channel), lambda i: (i, 0)),        # pre
                pl.BlockSpec((F, main_channel), const2),                   # w_in
                pl.BlockSpec((4, main_channel), const2),                   # biases
                pl.BlockSpec((3, main_channel, main_channel), const3),     # w_mid
                pl.BlockSpec((main_channel, out_pad), const2),             # w_o2
            ],
            out_specs=pl.BlockSpec((TB, out_pad), lambda i: (i, 0)),
        ),
        compiler_params=compiler_params,
    )(x_sur, pre, w_in, b_all, w_mid, w_o2)

    # strip batch padding and the lane-dense output padding
    return out[:B, :out_channels]


def init_params(key, n_class, main_channel, out_channels):
    """Deterministic synthetic parameters.  Weights stored as (in, out)."""
    keys = jax.random.split(key, 9)
    scale = 0.1

    def w(k, shape):
        return scale * jax.random.normal(k, shape, dtype=jnp.float32)

    return {
        "w_in": w(keys[0], (n_class, main_channel)),
        "b_in": w(keys[1], (1, main_channel)),
        "w_t1": w(keys[2], (main_channel, main_channel)),
        "b_t1": w(keys[3], (1, main_channel)),
        "w_t2": w(keys[4], (main_channel, main_channel)),
        "b_t2": w(keys[5], (1, main_channel)),
        "w_o1": w(keys[6], (main_channel, main_channel)),
        "b_o1": w(keys[7], (1, main_channel)),
        "w_o2": w(keys[8], (main_channel, out_channels)),
    }


def reference_forward(x, x_sur, p, *, n_class, main_channel):
    """Pure-JAX reference mirroring the PyTorch forward, for validation."""
    lrelu = lambda v: jnp.where(v > 0, v, 0.01 * v)
    pre = x[:, n_class:]
    fs = x_sur[:, :, :n_class]
    h = lrelu(fs @ p["w_in"] + p["b_in"][0])
    h = lrelu(h @ p["w_t1"] + p["b_t1"][0])
    h = lrelu(h @ p["w_t2"] + p["b_t2"][0])
    tmp = h.mean(axis=1) + pre
    t = lrelu(tmp @ p["w_o1"] + p["b_o1"][0])
    return t @ p["w_o2"]


if __name__ == "__main__":
    # Small shapes consistent with the module; B chosen so the batch grid
    # actually has >1 step (TB=8 -> grid of 2).
    B = 16           # batch
    S = 8            # number of surrounding points (reduced by mean)
    n_class = 26
    f_channels = 32  # == main_channel
    main_channel = f_channels
    out_channels = 16
    x_sur_feat = 32  # >= n_class (forward only uses the first n_class features)

    key = jax.random.PRNGKey(0)
    k_x, k_xs, k_p = jax.random.split(key, 3)

    x = jax.random.normal(k_x, (B, n_class + main_channel), dtype=jnp.float32)
    x_sur = jax.random.normal(k_xs, (B, S, x_sur_feat), dtype=jnp.float32)
    params = init_params(k_p, n_class, main_channel, out_channels)

    out = v2p_finetuner_forward(
        x, x_sur, params,
        n_class=n_class, main_channel=main_channel, out_channels=out_channels,
        batch_tile=8, use_bf16=False,   # use_bf16=True on v6e/v7x (loosen tol to ~1e-2)
    )
    out = jax.block_until_ready(out)

    ref = reference_forward(x, x_sur, params,
                            n_class=n_class, main_channel=main_channel)
    assert out.shape == (B, out_channels)
    assert jnp.allclose(out, ref, atol=1e-4, rtol=1e-4), "mismatch vs reference"

    print("KERNEL_OK")
</pallas_src>

<mosaic_0001>
module attributes {stable_mosaic.version = 11 : i64} {
  func.func @kernel(%arg0: i32, %arg1: memref<8x8x32xf32, #tpu.memory_space<vmem>>, %arg2: memref<8x32xf32, #tpu.memory_space<vmem>>, %arg3: memref<32x32xf32, #tpu.memory_space<vmem>>, %arg4: memref<4x32xf32, #tpu.memory_space<vmem>>, %arg5: memref<3x32x32xf32, #tpu.memory_space<vmem>>, %arg6: memref<32x128xf32, #tpu.memory_space<vmem>>, %arg7: memref<8x128xf32, #tpu.memory_space<vmem>>) attributes {dimension_semantics = [#tpu.dimension_semantics<parallel>], iteration_bounds = array<i64: 2>, scalar_prefetch = 0 : i64, scratch_operands = 0 : i64, tpu.core_type = #tpu.core_type<tc>, window_params = [{transform_indices = @transform_0, window_bounds = array<i64: 8, 8, 32>}, {transform_indices = @transform_1, window_bounds = array<i64: 8, 32>}, {pipeline_mode = #tpu.pipeline_mode<synchronous>, transform_indices = @transform_2, window_bounds = array<i64: 32, 32>}, {pipeline_mode = #tpu.pipeline_mode<synchronous>, transform_indices = @transform_3, window_bounds = array<i64: 4, 32>}, {pipeline_mode = #tpu.pipeline_mode<synchronous>, transform_indices = @transform_4, window_bounds = array<i64: 3, 32, 32>}, {pipeline_mode = #tpu.pipeline_mode<synchronous>, transform_indices = @transform_5, window_bounds = array<i64: 32, 128>}, {transform_indices = @transform_6, window_bounds = array<i64: 8, 128>}]} {
    %c0 = arith.constant 0 : index
    %c0_0 = arith.constant 0 : index
    %c0_1 = arith.constant 0 : index
    %0 = vector.load %arg1[%c0, %c0_0, %c0_1] : memref<8x8x32xf32, #tpu.memory_space<vmem>>, vector<8x8x32xf32>
    %1 = vector.shape_cast %0 : vector<8x8x32xf32> to vector<64x32xf32>
    %c0_2 = arith.constant 0 : index
    %c0_3 = arith.constant 0 : index
    %2 = vector.load %arg4[%c0_2, %c0_3] : memref<4x32xf32, #tpu.memory_space<vmem>>, vector<1x32xf32>
    %c1 = arith.constant 1 : index
    %c0_4 = arith.constant 0 : index
    %3 = vector.load %arg4[%c1, %c0_4] : memref<4x32xf32, #tpu.memory_space<vmem>>, vector<1x32xf32>
    %c2 = arith.constant 2 : index
    %c0_5 = arith.constant 0 : index
    %4 = vector.load %arg4[%c2, %c0_5] : memref<4x32xf32, #tpu.memory_space<vmem>>, vector<1x32xf32>
    %c3 = arith.constant 3 : index
    %c0_6 = arith.constant 0 : index
    %5 = vector.load %arg4[%c3, %c0_6] : memref<4x32xf32, #tpu.memory_space<vmem>>, vector<1x32xf32>
    %c0_7 = arith.constant 0 : index
    %c0_8 = arith.constant 0 : index
    %6 = vector.load %arg3[%c0_7, %c0_8] : memref<32x32xf32, #tpu.memory_space<vmem>>, vector<32x32xf32>
    %cst = arith.constant dense<0.000000e+00> : vector<64x32xf32>
    %7 = tpu.matmul %1, %6, %cst {dimension_numbers = #tpu.dot_dimension_numbers<[1], [0], [0], [1], [0, 0, 1, 1], [], []>} : vector<64x32xf32>, vector<32x32xf32>, vector<64x32xf32> -> vector<64x32xf32>
    %8 = vector.broadcast %2 : vector<1x32xf32> to vector<64x32xf32>
    %9 = arith.addf %7, %8 : vector<64x32xf32>
    %cst_9 = arith.constant 0.000000e+00 : f32
    %10 = vector.broadcast %cst_9 : f32 to vector<64x32xf32>
    %11 = arith.cmpf ogt, %9, %10 : vector<64x32xf32>
    %cst_10 = arith.constant 0.00999999977 : f32
    %12 = vector.broadcast %cst_10 : f32 to vector<64x32xf32>
    %13 = arith.mulf %12, %9 : vector<64x32xf32>
    %14 = arith.select %11, %9, %13 : vector<64x32xi1>, vector<64x32xf32>
    %c0_11 = arith.constant 0 : index
    %c0_12 = arith.constant 0 : index
    %c0_13 = arith.constant 0 : index
    %15 = vector.load %arg5[%c0_11, %c0_12, %c0_13] : memref<3x32x32xf32, #tpu.memory_space<vmem>>, vector<1x32x32xf32>
    %16 = vector.shape_cast %15 : vector<1x32x32xf32> to vector<32x32xf32>
    %cst_14 = arith.constant dense<0.000000e+00> : vector<64x32xf32>
    %17 = tpu.matmul %14, %16, %cst_14 {dimension_numbers = #tpu.dot_dimension_numbers<[1], [0], [0], [1], [0, 0, 1, 1], [], []>} : vector<64x32xf32>, vector<32x32xf32>, vector<64x32xf32> -> vector<64x32xf32>
    %18 = vector.broadcast %3 : vector<1x32xf32> to vector<64x32xf32>
    %19 = arith.addf %17, %18 : vector<64x32xf32>
    %cst_15 = arith.constant 0.000000e+00 : f32
    %20 = vector.broadcast %cst_15 : f32 to vector<64x32xf32>
    %21 = arith.cmpf ogt, %19, %20 : vector<64x32xf32>
    %cst_16 = arith.constant 0.00999999977 : f32
    %22 = vector.broadcast %cst_16 : f32 to vector<64x32xf32>
    %23 = arith.mulf %22, %19 : vector<64x32xf32>
    %24 = arith.select %21, %19, %23 : vector<64x32xi1>, vector<64x32xf32>
    %c1_17 = arith.constant 1 : index
    %c0_18 = arith.constant 0 : index
    %c0_19 = arith.constant 0 : index
    %25 = vector.load %arg5[%c1_17, %c0_18, %c0_19] : memref<3x32x32xf32, #tpu.memory_space<vmem>>, vector<1x32x32xf32>
    %26 = vector.shape_cast %25 : vector<1x32x32xf32> to vector<32x32xf32>
    %cst_20 = arith.constant dense<0.000000e+00> : vector<64x32xf32>
    %27 = tpu.matmul %24, %26, %cst_20 {dimension_numbers = #tpu.dot_dimension_numbers<[1], [0], [0], [1], [0, 0, 1, 1], [], []>} : vector<64x32xf32>, vector<32x32xf32>, vector<64x32xf32> -> vector<64x32xf32>
    %28 = vector.broadcast %4 : vector<1x32xf32> to vector<64x32xf32>
    %29 = arith.addf %27, %28 : vector<64x32xf32>
    %cst_21 = arith.constant 0.000000e+00 : f32
    %30 = vector.broadcast %cst_21 : f32 to vector<64x32xf32>
    %31 = arith.cmpf ogt, %29, %30 : vector<64x32xf32>
    %cst_22 = arith.constant 0.00999999977 : f32
    %32 = vector.broadcast %cst_22 : f32 to vector<64x32xf32>
    %33 = arith.mulf %32, %29 : vector<64x32xf32>
    %34 = arith.select %31, %29, %33 : vector<64x32xi1>, vector<64x32xf32>
    %35 = vector.shape_cast %34 : vector<64x32xf32> to vector<8x8x32xf32>
    %cst_23 = arith.constant dense<0.000000e+00> : vector<8x32xf32>
    %36 = vector.multi_reduction <add>, %35, %cst_23 [1] : vector<8x8x32xf32> to vector<8x32xf32>
    %cst_24 = arith.constant 8.000000e+00 : f32
    %37 = vector.broadcast %cst_24 : f32 to vector<8x32xf32>
    %38 = arith.divf %36, %37 : vector<8x32xf32>
    %c0_25 = arith.constant 0 : index
    %c0_26 = arith.constant 0 : index
    %39 = vector.load %arg2[%c0_25, %c0_26] : memref<8x32xf32, #tpu.memory_space<vmem>>, vector<8x32xf32>
    %40 = arith.addf %38, %39 : vector<8x32xf32>
    %c2_27 = arith.constant 2 : index
    %c0_28 = arith.constant 0 : index
    %c0_29 = arith.constant 0 : index
    %41 = vector.load %arg5[%c2_27, %c0_28, %c0_29] : memref<3x32x32xf32, #tpu.memory_space<vmem>>, vector<1x32x32xf32>
    %42 = vector.shape_cast %41 : vector<1x32x32xf32> to vector<32x32xf32>
    %cst_30 = arith.constant dense<0.000000e+00> : vector<8x32xf32>
    %43 = tpu.matmul %40, %42, %cst_30 {dimension_numbers = #tpu.dot_dimension_numbers<[1], [0], [0], [1], [0, 0, 1, 1], [], []>} : vector<8x32xf32>, vector<32x32xf32>, vector<8x32xf32> -> vector<8x32xf32>
    %44 = vector.broadcast %5 : vector<1x32xf32> to vector<8x32xf32>
    %45 = arith.addf %43, %44 : vector<8x32xf32>
    %cst_31 = arith.constant 0.000000e+00 : f32
    %46 = vector.broadcast %cst_31 : f32 to vector<8x32xf32>
    %47 = arith.cmpf ogt, %45, %46 : vector<8x32xf32>
    %cst_32 = arith.constant 0.00999999977 : f32
    %48 = vector.broadcast %cst_32 : f32 to vector<8x32xf32>
    %49 = arith.mulf %48, %45 : vector<8x32xf32>
    %50 = arith.select %47, %45, %49 : vector<8x32xi1>, vector<8x32xf32>
    %c0_33 = arith.constant 0 : index
    %c0_34 = arith.constant 0 : index
    %51 = vector.load %arg6[%c0_33, %c0_34] : memref<32x128xf32, #tpu.memory_space<vmem>>, vector<32x128xf32>
    %cst_35 = arith.constant dense<0.000000e+00> : vector<8x128xf32>
    %52 = tpu.matmul %50, %51, %cst_35 {dimension_numbers = #tpu.dot_dimension_numbers<[1], [0], [0], [1], [0, 0, 1, 1], [], []>} : vector<8x32xf32>, vector<32x128xf32>, vector<8x128xf32> -> vector<8x128xf32>
    %c0_36 = arith.constant 0 : index
    %c0_37 = arith.constant 0 : index
    %53 = vector.load %arg7[%c0_36, %c0_37] : memref<8x128xf32, #tpu.memory_space<vmem>>, vector<8x128xf32>
    tpu.vector_store %arg7[%c0_36, %c0_37], %52 {strides = array<i32>} : memref<8x128xf32, #tpu.memory_space<vmem>>, vector<8x128xf32>,
    return
  }
  func.func @transform_0(%arg0: i32) -> (i32, i32, i32) {
    %c0_i32 = arith.constant 0 : i32
    %c0_i32_0 = arith.constant 0 : i32
    %c0_i32_1 = arith.constant 0 : i32
    return %arg0, %c0_i32, %c0_i32_0 : i32, i32, i32
  }
  func.func @transform_1(%arg0: i32) -> (i32, i32) {
    %c0_i32 = arith.constant 0 : i32
    %c0_i32_0 = arith.constant 0 : i32
    return %arg0, %c0_i32 : i32, i32
  }
  func.func @transform_2(%arg0: i32) -> (i32, i32) {
    %c0_i32 = arith.constant 0 : i32
    %c0_i32_0 = arith.constant 0 : i32
    %c0_i32_1 = arith.constant 0 : i32
    return %c0_i32, %c0_i32_0 : i32, i32
  }
  func.func @transform_3(%arg0: i32) -> (i32, i32) {
    %c0_i32 = arith.constant 0 : i32
    %c0_i32_0 = arith.constant 0 : i32
    %c0_i32_1 = arith.constant 0 : i32
    return %c0_i32, %c0_i32_0 : i32, i32
  }
  func.func @transform_4(%arg0: i32) -> (i32, i32, i32) {
    %c0_i32 = arith.constant 0 : i32
    %c0_i32_0 = arith.constant 0 : i32
    %c0_i32_1 = arith.constant 0 : i32
    %c0_i32_2 = arith.constant 0 : i32
    return %c0_i32, %c0_i32_0, %c0_i32_1 : i32, i32, i32
  }
  func.func @transform_5(%arg0: i32) -> (i32, i32) {
    %c0_i32 = arith.constant 0 : i32
    %c0_i32_0 = arith.constant 0 : i32
    %c0_i32_1 = arith.constant 0 : i32
    return %c0_i32, %c0_i32_0 : i32, i32
  }
  func.func @transform_6(%arg0: i32) -> (i32, i32) {
    %c0_i32 = arith.constant 0 : i32
    %c0_i32_0 = arith.constant 0 : i32
    return %arg0, %c0_i32 : i32, i32
  }
}

</mosaic_0001>

<llo_original>
// kernel: tpu_custom_call.1
$region0: #{tpu_custom_call.1}
  #allocation0 [shape = 'u32[]', space=smem, size = 0x4, offset = 0x4, fixed_abs, tag = 'smem constant byte address 0x4 - core index']
  #allocation1 [shape = 'u32[144,128]{1,0:T(1,128)}', space=vmem, size = 0x12000, scoped, tag = 'internal scratch']
  %s0 = inlined_call_operand.hbm [shape: f32[16,8,32], index: 0, kind: input, shape index: {}]
  %s1 = inlined_call_operand.hbm [shape: f32[16,32], index: 1, kind: input, shape index: {}]
  %s2 = inlined_call_operand.hbm [shape: f32[32,32], index: 2, kind: input, shape index: {}]
  %s3 = inlined_call_operand.vmem [shape: f32[4,32], index: 3, kind: input, shape index: {}]
  %s4 = inlined_call_operand.hbm [shape: f32[3,32,32], index: 4, kind: input, shape index: {}]
  %s5 = inlined_call_operand.hbm [shape: f32[32,128], index: 5, kind: input, shape index: {}]
  %s6 = inlined_call_operand.hbm [shape: f32[16,128], index: 6, kind: output, shape index: {}]
  %s7 = sld [smem:[#allocation0]]
  $region77: #{tpu_custom_call.1} parent=0
    _
  %s9 = ssub.s32 1, %s7
  %s10 = scalar_select 0, %s9, %s7
  $region1: #{tpu_custom_call.1} parent=0
    #allocation2 [shape = 'u8[65536]{0}', space=vmem, size = 0x10000, scoped, tag = 'input window, operand 0']
    #allocation3 [shape = 's32[2]{0}', space=sflag, size = 0x8, scoped, tag = 'scoped memory for tpu_custom_call.1']
    #allocation4 [shape = 's32[2]{0}', space=sflag, size = 0x8, scoped, tag = 'scoped memory for tpu_custom_call.1']
    #allocation5 [shape = 'u8[8192]{0}', space=vmem, size = 0x2000, scoped, tag = 'input window, operand 1']
    #allocation6 [shape = 's32[2]{0}', space=sflag, size = 0x8, scoped, tag = 'scoped memory for tpu_custom_call.1']
    #allocation7 [shape = 'u8[16384]{0}', space=vmem, size = 0x4000, scoped, tag = 'input window, operand 2, single buffered']
    #allocation8 [shape = 'u8[49152]{0}', space=vmem, size = 0xc000, scoped, tag = 'input window, operand 4, single buffered']
    #allocation9 [shape = 's32[1]{0}', space=sflag, size = 0x4, scoped, tag = 'scoped memory for tpu_custom_call.1']
    #allocation10 [shape = 'u8[16384]{0}', space=vmem, size = 0x4000, scoped, tag = 'input window, operand 5, single buffered']
    #allocation11 [shape = 'u8[8192]{0}', space=vmem, size = 0x2000, scoped, tag = 'output window, operand 0']
    %11 = vsyncpa [#allocation3], 0
    %s12 = scalar_lea.sflag [#allocation3], 1
    %13 = vsyncpa %s12, 0
    %14 = vsyncpa [#allocation6], 0
    %s15 = scalar_lea.sflag [#allocation6], 1
    %16 = vsyncpa %s15, 0
    %17 = vsyncpa [#allocation9], 0
    %18 = vsyncpa [#allocation4], 0
    %s19 = scalar_lea.sflag [#allocation4], 1
    %20 = vsyncpa %s19, 0
    loop: start=0, step=1, limit=4
    $region2: #{tpu_custom_call.1} parent=1 // loop_pre_header
      _
    $region3: #{tpu_custom_call.1} parent=1 // loop_header
      %s22 = sphi 0, %s26
      %p23 = scmp.ge.s32.totalorder %s22, 4
      %s32 = sphi 0, %s34
      %s35 = sphi 0, %s32
      %s36 = sphi 0, %s35
      %s52 = sphi 0, %s36
      %s58 = sphi 0, %s60
      %s61 = sphi 0, %s58
      %s62 = sphi 0, %s61
      %s78 = sphi 0, %s62
      %s82 = sphi 0, %s82
      %s84 = sphi 0, %s82
      %s85 = sphi 0, %s84
      %s99 = sphi 0, %s85
      %s103 = sphi 0, %s103
      %s105 = sphi 0, %s103
      %s106 = sphi 0, %s105
      %s120 = sphi 0, %s106
      %s124 = sphi 0, %s124
      %s126 = sphi 0, %s124
      %s127 = sphi 0, %s126
      %s141 = sphi 0, %s127
      %s145 = sphi 0, %s145
      %s147 = sphi 0, %s145
      %s148 = sphi 0, %s147
      %s162 = sphi 0, %s148
      %s168 = sphi 0, %s170
      %s171 = sphi 0, %s168
      %s172 = sphi 0, %s171
      %s188 = sphi 0, %s172
    $region4: #{tpu_custom_call.1} parent=1 // loop_header_branch
      %25 = sbr.rel (%p23) target = $region8
    $region5: #{tpu_custom_call.1} parent=1 // loop_body
      %s27 = ssub.s32 %s22, 1
      %s28 = ssub.s32 %s22, 2
      %s29 = sadd.s32 %s22, 1
      %s30 = ssub.s32 %s22, %s29
      %p31 = scmp.eq.s32.totalorder %s30, 0
      %s33 = sadd.s32 %s32, 1
      %s34 = scalar_select %p31, %s32, %s33
      %p37 = pneg %p31
      %p38 = scmp.eq.s32.totalorder %s22, 1
      %p39 = por %p37, %p38
      %p40 = scmp.ne.s32.totalorder %s32, %s35
      %p41 = scmp.eq.s32.totalorder %s22, 0
      %p42 = por %p40, %p41
      %p43 = scmp.ne.s32.totalorder %s32, %s35
      %p44 = scmp.eq.s32.totalorder %s27, 1
      %p45 = por %p43, %p44
      %p46 = scmp.ne.s32.totalorder %s35, %s36
      %p47 = scmp.eq.s32.totalorder %s27, 0
      %p48 = por %p46, %p47
      %p49 = scmp.ne.s32.totalorder %s35, %s36
      %p50 = scmp.eq.s32.totalorder %s28, 1
      %p51 = por %p49, %p50
      %p53 = scmp.ne.s32.totalorder %s36, %s52
      %p54 = scmp.eq.s32.totalorder %s28, 0
      %p55 = por %p53, %p54
      %s56 = ssub.s32 %s22, %s29
      %p57 = scmp.eq.s32.totalorder %s56, 0
      %s59 = sadd.s32 %s58, 1
      %s60 = scalar_select %p57, %s58, %s59
      %p63 = pneg %p57
      %p64 = scmp.eq.s32.totalorder %s22, 1
      %p65 = por %p63, %p64
      %p66 = scmp.ne.s32.totalorder %s58, %s61
      %p67 = scmp.eq.s32.totalorder %s22, 0
      %p68 = por %p66, %p67
      %p69 = scmp.ne.s32.totalorder %s58, %s61
      %p70 = scmp.eq.s32.totalorder %s27, 1
      %p71 = por %p69, %p70
      %p72 = scmp.ne.s32.totalorder %s61, %s62
      %p73 = scmp.eq.s32.totalorder %s27, 0
      %p74 = por %p72, %p73
      %p75 = scmp.ne.s32.totalorder %s61, %s62
      %p76 = scmp.eq.s32.totalorder %s28, 1
      %p77 = por %p75, %p76
      %p79 = scmp.ne.s32.totalorder %s62, %s78
      %p80 = scmp.eq.s32.totalorder %s28, 0
      %p81 = por %p79, %p80
      %s83 = sadd.s32 %s82, 1
      %p86 = scmp.eq.s32.totalorder %s22, 1
      %p87 = scmp.ne.s32.totalorder %s82, %s84
      %p88 = scmp.eq.s32.totalorder %s22, 0
      %p89 = por %p87, %p88
      %p90 = scmp.ne.s32.totalorder %s82, %s84
      %p91 = scmp.eq.s32.totalorder %s27, 1
      %p92 = por %p90, %p91
      %p93 = scmp.ne.s32.totalorder %s84, %s85
      %p94 = scmp.eq.s32.totalorder %s27, 0
      %p95 = por %p93, %p94
      %p96 = scmp.ne.s32.totalorder %s84, %s85
      %p97 = scmp.eq.s32.totalorder %s28, 1
      %p98 = por %p96, %p97
      %p100 = scmp.ne.s32.totalorder %s85, %s99
      %p101 = scmp.eq.s32.totalorder %s28, 0
      %p102 = por %p100, %p101
      %s104 = sadd.s32 %s103, 1
      %p107 = scmp.eq.s32.totalorder %s22, 1
      %p108 = scmp.ne.s32.totalorder %s103, %s105
      %p109 = scmp.eq.s32.totalorder %s22, 0
      %p110 = por %p108, %p109
      %p111 = scmp.ne.s32.totalorder %s103, %s105
      %p112 = scmp.eq.s32.totalorder %s27, 1
      %p113 = por %p111, %p112
      %p114 = scmp.ne.s32.totalorder %s105, %s106
      %p115 = scmp.eq.s32.totalorder %s27, 0
      %p116 = por %p114, %p115
      %p117 = scmp.ne.s32.totalorder %s105, %s106
      %p118 = scmp.eq.s32.totalorder %s28, 1
      %p119 = por %p117, %p118
      %p121 = scmp.ne.s32.totalorder %s106, %s120
      %p122 = scmp.eq.s32.totalorder %s28, 0
      %p123 = por %p121, %p122
      %s125 = sadd.s32 %s124, 1
      %p128 = scmp.eq.s32.totalorder %s22, 1
      %p129 = scmp.ne.s32.totalorder %s124, %s126
      %p130 = scmp.eq.s32.totalorder %s22, 0
      %p131 = por %p129, %p130
      %p132 = scmp.ne.s32.totalorder %s124, %s126
      %p133 = scmp.eq.s32.totalorder %s27, 1
      %p134 = por %p132, %p133
      %p135 = scmp.ne.s32.totalorder %s126, %s127
      %p136 = scmp.eq.s32.totalorder %s27, 0
      %p137 = por %p135, %p136
      %p138 = scmp.ne.s32.totalorder %s126, %s127
      %p139 = scmp.eq.s32.totalorder %s28, 1
      %p140 = por %p138, %p139
      %p142 = scmp.ne.s32.totalorder %s127, %s141
      %p143 = scmp.eq.s32.totalorder %s28, 0
      %p144 = por %p142, %p143
      %s146 = sadd.s32 %s145, 1
      %p149 = scmp.eq.s32.totalorder %s22, 1
      %p150 = scmp.ne.s32.totalorder %s145, %s147
      %p151 = scmp.eq.s32.totalorder %s22, 0
      %p152 = por %p150, %p151
      %p153 = scmp.ne.s32.totalorder %s145, %s147
      %p154 = scmp.eq.s32.totalorder %s27, 1
      %p155 = por %p153, %p154
      %p156 = scmp.ne.s32.totalorder %s147, %s148
      %p157 = scmp.eq.s32.totalorder %s27, 0
      %p158 = por %p156, %p157
      %p159 = scmp.ne.s32.totalorder %s147, %s148
      %p160 = scmp.eq.s32.totalorder %s28, 1
      %p161 = por %p159, %p160
      %p163 = scmp.ne.s32.totalorder %s148, %s162
      %p164 = scmp.eq.s32.totalorder %s28, 0
      %p165 = por %p163, %p164
      %s166 = ssub.s32 %s22, %s29
      %p167 = scmp.eq.s32.totalorder %s166, 0
      %s169 = sadd.s32 %s168, 1
      %s170 = scalar_select %p167, %s168, %s169
      %p173 = pneg %p167
      %p174 = scmp.eq.s32.totalorder %s22, 1
      %p175 = por %p173, %p174
      %p176 = scmp.ne.s32.totalorder %s168, %s171
      %p177 = scmp.eq.s32.totalorder %s22, 0
      %p178 = por %p176, %p177
      %p179 = scmp.ne.s32.totalorder %s168, %s171
      %p180 = scmp.eq.s32.totalorder %s27, 1
      %p181 = por %p179, %p180
      %p182 = scmp.ne.s32.totalorder %s171, %s172
      %p183 = scmp.eq.s32.totalorder %s27, 0
      %p184 = por %p182, %p183
      %p185 = scmp.ne.s32.totalorder %s171, %s172
      %p186 = scmp.eq.s32.totalorder %s28, 1
      %p187 = por %p185, %p186
      %p189 = scmp.ne.s32.totalorder %s172, %s188
      %p190 = scmp.eq.s32.totalorder %s28, 0
      %p191 = por %p189, %p190
      %p192 = scmp.le.s32.totalorder 1, %s22
      %p193 = scmp.lt.s32.totalorder %s22, 3
      %p194 = pnand %p192, %p193
      %p195 = pneg %p194
      // Predicated region
      $region9: #{tpu_custom_call.1} parent=5 // pred_check
        _
      $region10: #{tpu_custom_call.1} parent=5 // pred_check_branch
        %197 = sbr.rel (%p194) target = $region12
      $region11: #{tpu_custom_call.1} parent=5 // pred_region
        %s198 = ssub.s32 %s22, 1
        // Predicated region
        $region13: #{tpu_custom_call.1} parent=11 // pred_check
          %p199 = pneg %p95
        $region14: #{tpu_custom_call.1} parent=11 // pred_check_branch
          %201 = sbr.rel (%p199) target = $region16
        $region15: #{tpu_custom_call.1} parent=11 // pred_region
          %s203 = ssub.s32 512, 512
          %204 = vsyncadd [#allocation6], %s203
          %s205 = sshll.u32 [#allocation7], 4
          %s206 = int_to_ptr.vmem [resolvable:$true] %s205
          %211 = dma.hbm_to_vmem [thread:$0]  %s2, 512, %s206, [#allocation6], 128, 128, 8
        $region16: #{tpu_custom_call.1} parent=11 // pred_fallthru
          _
        // Predicated region
        $region17: #{tpu_custom_call.1} parent=11 // pred_check
          %p212 = pneg %p116
        $region18: #{tpu_custom_call.1} parent=11 // pred_check_branch
          %214 = sbr.rel (%p212) target = $region20
        $region19: #{tpu_custom_call.1} parent=11 // pred_region
          _
        $region20: #{tpu_custom_call.1} parent=11 // pred_fallthru
          _
        // Predicated region
        $region21: #{tpu_custom_call.1} parent=11 // pred_check
          %p215 = pneg %p137
        $region22: #{tpu_custom_call.1} parent=11 // pred_check_branch
          %217 = sbr.rel (%p215) target = $region24
        $region23: #{tpu_custom_call.1} parent=11 // pred_region
          %s219 = ssub.s32 1536, 1536
          %220 = vsyncadd [#allocation9], %s219
          %s221 = sshll.u32 [#allocation8], 4
          %s222 = int_to_ptr.vmem [resolvable:$true] %s221
          %227 = dma.hbm_to_vmem [thread:$0]  %s4, 1536, %s222, [#allocation9], 128, 128, 8
        $region24: #{tpu_custom_call.1} parent=11 // pred_fallthru
          _
        // Predicated region
        $region25: #{tpu_custom_call.1} parent=11 // pred_check
          %p228 = pneg %p158
        $region26: #{tpu_custom_call.1} parent=11 // pred_check_branch
          %230 = sbr.rel (%p228) target = $region28
        $region27: #{tpu_custom_call.1} parent=11 // pred_region
          %s232 = ssub.s32 512, 512
          %233 = vsyncadd [#allocation9], %s232
          %s234 = sshll.u32 [#allocation10], 4
          %s235 = int_to_ptr.vmem [resolvable:$true] %s234
          %240 = dma.hbm_to_vmem [thread:$0]  %s5, 512, %s235, [#allocation9], 128, 128, 8
        $region28: #{tpu_custom_call.1} parent=11 // pred_fallthru
          _
      $region12: #{tpu_custom_call.1} parent=5 // pred_fallthru
        _
      %p241 = scmp.lt.s32.totalorder %s22, 2
      // Predicated region
      $region29: #{tpu_custom_call.1} parent=5 // pred_check
        %p242 = pneg %p241
      $region30: #{tpu_custom_call.1} parent=5 // pred_check_branch
        %244 = sbr.rel (%p242) target = $region32
      $region31: #{tpu_custom_call.1} parent=5 // pred_region
        // Predicated region
        $region33: #{tpu_custom_call.1} parent=31 // pred_check
          %p245 = pneg %p42
        $region34: #{tpu_custom_call.1} parent=31 // pred_check_branch
          %247 = sbr.rel (%p245) target = $region36
        $region35: #{tpu_custom_call.1} parent=31 // pred_region
          %s248 = sand.u32 %s32, 1
          %s249 = scalar_lea.sflag [#allocation3], %s248
          %s250 = sand.u32 %s32, 1
          %s251 = smul.addr %s250, 64
          %s252 = scalar_lea.vmem [#allocation2], %s251
          %s253 = smul.u32 8, %s22
          %s255 = ssub.s32 1024, 1024
          %256 = vsyncadd %s249, %s255
          %s257 = smul.addr %s253, 128
          %s258 = scalar_lea.hbm %s0, %s257
          %s259 = sshll.u32 %s252, 4
          %s260 = int_to_ptr.vmem [resolvable:$true] %s259
          %265 = dma.hbm_to_vmem [thread:$0]  %s258, 1024, %s260, %s249, 128, 128, 8
        $region36: #{tpu_custom_call.1} parent=31 // pred_fallthru
          _
        // Predicated region
        $region37: #{tpu_custom_call.1} parent=31 // pred_check
          %p266 = pneg %p68
        $region38: #{tpu_custom_call.1} parent=31 // pred_check_branch
          %268 = sbr.rel (%p266) target = $region40
        $region39: #{tpu_custom_call.1} parent=31 // pred_region
          %s269 = sand.u32 %s22, 1
          %s270 = scalar_lea.sflag [#allocation6], %s269
          %s271 = sand.u32 %s58, 1
          %s272 = smul.addr %s271, 8
          %s273 = scalar_lea.vmem [#allocation5], %s272
          %s275 = ssub.s32 128, 128
          %276 = vsyncadd %s270, %s275
          %s277 = smul.addr %s22, 128
          %s278 = scalar_lea.hbm %s1, %s277
          %s280 = sshll.u32 %s273, 4
          %s281 = int_to_ptr.vmem [resolvable:$true] %s280
          %283 = dma.hbm_to_vmem [thread:$0]  %s278, 128, %s281, %s270
        $region40: #{tpu_custom_call.1} parent=31 // pred_fallthru
          _
      $region32: #{tpu_custom_call.1} parent=5 // pred_fallthru
        _
      %p284 = scmp.le.s32.totalorder 1, %s22
      %p285 = scmp.lt.s32.totalorder %s22, 3
      %p286 = pnand %p284, %p285
      %p287 = pneg %p286
      // Predicated region
      $region41: #{tpu_custom_call.1} parent=5 // pred_check
        _
      $region42: #{tpu_custom_call.1} parent=5 // pred_check_branch
        %289 = sbr.rel (%p286) target = $region44
      $region43: #{tpu_custom_call.1} parent=5 // pred_region
        %s290 = ssub.s32 %s22, 1
        %s291 = sand.u32 %s35, 1
        %s292 = scalar_lea.sflag [#allocation3], %s291
        %s293 = sand.u32 %s35, 1
        %s294 = smul.addr %s293, 64
        %s295 = scalar_lea.vmem [#allocation2], %s294
        // Predicated region
        $region45: #{tpu_custom_call.1} parent=43 // pred_check
          %p296 = pneg %p48
        $region46: #{tpu_custom_call.1} parent=43 // pred_check_branch
          %298 = sbr.rel (%p296) target = $region48
        $region47: #{tpu_custom_call.1} parent=43 // pred_region
          %299 = dma.done %s292, 1024
        $region48: #{tpu_custom_call.1} parent=43 // pred_fallthru
          _
        %s300 = sand.u32 %s27, 1
        %s301 = scalar_lea.sflag [#allocation6], %s300
        %s302 = sand.u32 %s61, 1
        %s303 = smul.addr %s302, 8
        %s304 = scalar_lea.vmem [#allocation5], %s303
        // Predicated region
        $region49: #{tpu_custom_call.1} parent=43 // pred_check
          %p305 = pneg %p74
        $region50: #{tpu_custom_call.1} parent=43 // pred_check_branch
          %307 = sbr.rel (%p305) target = $region52
        $region51: #{tpu_custom_call.1} parent=43 // pred_region
          %308 = dma.done %s301, 128
        $region52: #{tpu_custom_call.1} parent=43 // pred_fallthru
          _
        // Predicated region
        $region53: #{tpu_custom_call.1} parent=43 // pred_check
          %p309 = pneg %p95
        $region54: #{tpu_custom_call.1} parent=43 // pred_check_branch
          %311 = sbr.rel (%p309) target = $region56
        $region55: #{tpu_custom_call.1} parent=43 // pred_region
          %312 = dma.done [#allocation6], 512
        $region56: #{tpu_custom_call.1} parent=43 // pred_fallthru
          _
        // Predicated region
        $region57: #{tpu_custom_call.1} parent=43 // pred_check
          %p313 = pneg %p137
        $region58: #{tpu_custom_call.1} parent=43 // pred_check_branch
          %315 = sbr.rel (%p313) target = $region60
        $region59: #{tpu_custom_call.1} parent=43 // pred_region
          %316 = dma.done [#allocation9], 1536
        $region60: #{tpu_custom_call.1} parent=43 // pred_fallthru
          _
        // Predicated region
        $region61: #{tpu_custom_call.1} parent=43 // pred_check
          %p317 = pneg %p158
        $region62: #{tpu_custom_call.1} parent=43 // pred_check_branch
          %319 = sbr.rel (%p317) target = $region64
        $region63: #{tpu_custom_call.1} parent=43 // pred_region
          %320 = dma.done [#allocation9], 512
        $region64: #{tpu_custom_call.1} parent=43 // pred_fallthru
          _
        %s321 = sand.u32 %s35, 1
        %s322 = scalar_lea.sflag [#allocation3], %s321
        %s323 = sand.u32 %s35, 1
        %s324 = smul.addr %s323, 64
        %s325 = scalar_lea.vmem [#allocation2], %s324
        %p326 = pneg %p48
        %p327 = pneg %p45
        %s328 = sand.u32 %s27, 1
        %s329 = scalar_lea.sflag [#allocation6], %s328
        %s330 = sand.u32 %s61, 1
        %s331 = smul.addr %s330, 8
        %s332 = scalar_lea.vmem [#allocation5], %s331
        %p333 = pneg %p74
        %p334 = pneg %p71
        %p335 = pneg %p95
        %p336 = pneg %p92
        %p337 = pneg %p116
        %p338 = pneg %p113
        %p339 = pneg %p137
        %p340 = pneg %p134
        %p341 = pneg %p158
        %p342 = pneg %p155
        %p343 = pneg %p184
        %p344 = pneg %p181
        %s345 = sand.u32 %s171, 1
        %s346 = scalar_lea.sflag [#allocation4], %s345
        %s347 = sand.u32 %s171, 1
        %s348 = smul.addr %s347, 8
        %s349 = scalar_lea.vmem [#allocation11], %s348
        %s350 = smul.u32 8, %s27
        %v351 = vld [vmem:[%s295] sm:$0xff]
        %v352 = vld [vmem:[%s295 + $0x8] sm:$0xff]
        %v353 = vld [vmem:[%s295 + $0x10] sm:$0xff]
        %v354 = vld [vmem:[%s295 + $0x18] sm:$0xff]
        %v355 = vld [vmem:[%s295 + $0x20] sm:$0xff]
        %v356 = vld [vmem:[%s295 + $0x28] sm:$0xff]
        %v357 = vld [vmem:[%s295 + $0x30] sm:$0xff]
        %v358 = vld [vmem:[%s295 + $0x38] sm:$0xff]
        %v359 = vld [vmem:[%s3] sm:$0x1]
        %v360 = vld [vmem:[%s3 + $0x1] sm:$0x1]
        %v361 = vld [vmem:[%s3 + $0x2] sm:$0x1]
        %v362 = vld [vmem:[%s3 + $0x3] sm:$0x1]
        %v363 = vld [vmem:[#allocation7] sm:$0xff]
        %v364 = vld [vmem:[#allocation7 + $0x8] sm:$0xff]
        %v365 = vld [vmem:[#allocation7 + $0x10] sm:$0xff]
        %v366 = vld [vmem:[#allocation7 + $0x18] sm:$0xff]
        %v367 = vlaneseq
        %v368 = vshrl.u32 %v367, 7
        %v369 = vsub.s32 0, %v368
        %v370 = vrot.slane %v359, %v369
        %vm371 = vcmask 261120
        %v373 = vsel %vm371, %v351, 0
        %v376 = vsel %vm371, %v352, 0
        %v379 = vsel %vm371, %v353, 0
        %v382 = vsel %vm371, %v354, 0
        %v385 = vsel %vm371, %v355, 0
        %v388 = vsel %vm371, %v356, 0
        %v391 = vsel %vm371, %v357, 0
        %v394 = vsel %vm371, %v358, 0
        %396 = vmatprep.subr.mxu0 0.0
        %397 = vmatpush1.msra.mxu0 %v363
        %398 = vmatprep.subr.mxu0 0.0
        %399 = vmatpush1.msra.mxu0 %v364
        %400 = vmatprep.subr.mxu0 0.0
        %401 = vmatpush1.msra.mxu0 %v365
        %402 = vmatprep.subr.mxu0 0.0
        %403 = vmatpush1.msra.mxu0 %v366
        %404 = vmatprep.subr.mxu0 0.0
        %405 = vmatpush1.msra.mxu0 0.0
        %406 = vmatprep.subr.mxu0 0.0
        %407 = vmatpush1.msra.mxu0 0.0
        %408 = vmatprep.subr.mxu0 0.0
        %409 = vmatpush1.msra.mxu0 0.0
        %410 = vmatprep.subr.mxu0 0.0
        %411 = vmatpush1.msra.mxu0 0.0
        %412 = vmatprep.subr.mxu0 0.0
        %413 = vmatpush1.msra.mxu0 0.0
        %414 = vmatprep.subr.mxu0 0.0
        %415 = vmatpush1.msra.mxu0 0.0
        %416 = vmatprep.subr.mxu0 0.0
        %417 = vmatpush1.msra.mxu0 0.0
        %418 = vmatprep.subr.mxu0 0.0
        %419 = vmatpush1.msra.mxu0 0.0
        %420 = vmatprep.subr.mxu0 0.0
        %421 = vmatpush1.msra.mxu0 0.0
        %422 = vmatprep.subr.mxu0 0.0
        %423 = vmatpush1.msra.mxu0 0.0
        %424 = vmatprep.subr.mxu0 0.0
        %425 = vmatpush1.msra.mxu0 0.0
        %426 = vmatprep.subr.mxu0 0.0
        %427 = vmatpush1.msra.mxu0 0.0
        %428 = vmatprep.subr.mxu0 0.0
        %429 = vmatpush1.msra.mxu0 0.0
        %430 = vmatprep.subr.mxu0 0.0
        %431 = vmatpush1.msra.mxu0 0.0
        %432 = vmatprep.subr.mxu0 0.0
        %433 = vmatpush1.msra.mxu0 0.0
        %434 = vmatprep.subr.mxu0 0.0
        %435 = vmatpush1.msra.mxu0 0.0
        %436 = vmatprep.subr.mxu0 0.0
        %437 = vmatpush1.msra.mxu0 0.0
        %438 = vmatprep.subr.mxu0 0.0
        %439 = vmatpush1.msra.mxu0 0.0
        %440 = vmatprep.subr.mxu0 0.0
        %441 = vmatpush1.msra.mxu0 0.0
        %442 = vmatprep.subr.mxu0 0.0
        %443 = vmatpush1.msra.mxu0 0.0
        %444 = vmatprep.subr.mxu0 0.0
        %445 = vmatpush1.msra.mxu0 0.0
        %446 = vmatprep.subr.mxu0 0.0
        %447 = vmatpush1.msra.mxu0 0.0
        %448 = vmatprep.subr.mxu0 0.0
        %449 = vmatpush1.msra.mxu0 0.0
        %450 = vmatprep.subr.mxu0 0.0
        %451 = vmatpush1.msra.mxu0 0.0
        %452 = vmatprep.subr.mxu0 0.0
        %453 = vmatpush1.msra.mxu0 0.0
        %454 = vmatprep.subr.mxu0 0.0
        %455 = vmatpush1.msra.mxu0 0.0
        %456 = vmatprep.subr.mxu0 0.0
        %457 = vmatpush1.msra.mxu0 0.0
        %458 = vmatprep.subr.mxu0 0.0
        %459 = vmatpush1.msra.mxu0 0.0
        %460 = vmatprep.mubr.f32.mxu0 0.0
        %461 = vmatmul.mubr.f32.gmra.mrb[0].mxu0 %v373
        %v462 = vpop.f32.mrb[0].mxu0
        %v463 = vadd.f32 %v370, %v462
        %v464 = vpop.f32.mrb[0].mxu0
        %465 = vmatprep.mubr.f32.mxu0 0.0
        %466 = vmatmul.mubr.f32.gmra.mrb[0].mxu0 %v376
        %v467 = vpop.f32.mrb[0].mxu0
        %v468 = vadd.f32 %v370, %v467
        %v469 = vpop.f32.mrb[0].mxu0
        %470 = vmatprep.mubr.f32.mxu0 0.0
        %471 = vmatmul.mubr.f32.gmra.mrb[0].mxu0 %v379
        %v472 = vpop.f32.mrb[0].mxu0
        %v473 = vadd.f32 %v370, %v472
        %v474 = vpop.f32.mrb[0].mxu0
        %475 = vmatprep.mubr.f32.mxu0 0.0
        %476 = vmatmul.mubr.f32.gmra.mrb[0].mxu0 %v382
        %v477 = vpop.f32.mrb[0].mxu0
        %v478 = vadd.f32 %v370, %v477
        %v479 = vpop.f32.mrb[0].mxu0
        %480 = vmatprep.mubr.f32.mxu0 0.0
        %481 = vmatmul.mubr.f32.gmra.mrb[0].mxu0 %v385
        %v482 = vpop.f32.mrb[0].mxu0
        %v483 = vadd.f32 %v370, %v482
        %v484 = vpop.f32.mrb[0].mxu0
        %485 = vmatprep.mubr.f32.mxu0 0.0
        %486 = vmatmul.mubr.f32.gmra.mrb[0].mxu0 %v388
        %v487 = vpop.f32.mrb[0].mxu0
        %v488 = vadd.f32 %v370, %v487
        %v489 = vpop.f32.mrb[0].mxu0
        %490 = vmatprep.mubr.f32.mxu0 0.0
        %491 = vmatmul.mubr.f32.gmra.mrb[0].mxu0 %v391
        %v492 = vpop.f32.mrb[0].mxu0
        %v493 = vadd.f32 %v370, %v492
        %v494 = vpop.f32.mrb[0].mxu0
        %495 = vmatprep.mubr.f32.mxu0 0.0
        %496 = vmatmul.mubr.f32.gmra.mrb[0].mxu0 %v394
        %v497 = vpop.f32.mrb[0].mxu0
        %v498 = vadd.f32 %v370, %v497
        %v499 = vpop.f32.mrb[0].mxu0
        %500 = vdwg.mxu0
        %vm501 = vcmp.gt.f32.partialorder %v463, 0.0
        %vm502 = vcmp.gt.f32.partialorder %v468, 0.0
        %vm503 = vcmp.gt.f32.partialorder %v473, 0.0
        %vm504 = vcmp.gt.f32.partialorder %v478, 0.0
        %vm505 = vcmp.gt.f32.partialorder %v483, 0.0
        %vm506 = vcmp.gt.f32.partialorder %v488, 0.0
        %vm507 = vcmp.gt.f32.partialorder %v493, 0.0
        %vm508 = vcmp.gt.f32.partialorder %v498, 0.0
        %v509 = vmul.f32 %v463, 0.01
        %v510 = vmul.f32 %v468, 0.01
        %v511 = vmul.f32 %v473, 0.01
        %v512 = vmul.f32 %v478, 0.01
        %v513 = vmul.f32 %v483, 0.01
        %v514 = vmul.f32 %v488, 0.01
        %v515 = vmul.f32 %v493, 0.01
        %v516 = vmul.f32 %v498, 0.01
        %v517 = vsel %vm501, %v463, %v509
        %v518 = vsel %vm502, %v468, %v510
        %v519 = vsel %vm503, %v473, %v511
        %v520 = vsel %vm504, %v478, %v512
        %v521 = vsel %vm505, %v483, %v513
        %v522 = vsel %vm506, %v488, %v514
        %v523 = vsel %vm507, %v493, %v515
        %v524 = vsel %vm508, %v498, %v516
        %v525 = vld [vmem:[#allocation8] sm:$0xff]
        %v526 = vld [vmem:[#allocation8 + $0x8] sm:$0xff]
        %v527 = vld [vmem:[#allocation8 + $0x10] sm:$0xff]
        %v528 = vld [vmem:[#allocation8 + $0x18] sm:$0xff]
        %v529 = vlaneseq
        %v530 = vshrl.u32 %v529, 7
        %v531 = vsub.s32 0, %v530
        %v532 = vrot.slane %v360, %v531
        %v534 = vsel %vm371, %v517, 0
        %v537 = vsel %vm371, %v518, 0
        %v540 = vsel %vm371, %v519, 0
        %v543 = vsel %vm371, %v520, 0
        %v546 = vsel %vm371, %v521, 0
        %v549 = vsel %vm371, %v522, 0
        %v552 = vsel %vm371, %v523, 0
        %v555 = vsel %vm371, %v524, 0
        %557 = vmatprep.subr.mxu0 0.0
        %558 = vmatpush1.msra.mxu0 %v525
        %559 = vmatprep.subr.mxu0 0.0
        %560 = vmatpush1.msra.mxu0 %v526
        %561 = vmatprep.subr.mxu0 0.0
        %562 = vmatpush1.msra.mxu0 %v527
        %563 = vmatprep.subr.mxu0 0.0
        %564 = vmatpush1.msra.mxu0 %v528
        %565 = vmatprep.subr.mxu0 0.0
        %566 = vmatpush1.msra.mxu0 0.0
        %567 = vmatprep.subr.mxu0 0.0
        %568 = vmatpush1.msra.mxu0 0.0
        %569 = vmatprep.subr.mxu0 0.0
        %570 = vmatpush1.msra.mxu0 0.0
        %571 = vmatprep.subr.mxu0 0.0
        %572 = vmatpush1.msra.mxu0 0.0
        %573 = vmatprep.subr.mxu0 0.0
        %574 = vmatpush1.msra.mxu0 0.0
        %575 = vmatprep.subr.mxu0 0.0
        %576 = vmatpush1.msra.mxu0 0.0
        %577 = vmatprep.subr.mxu0 0.0
        %578 = vmatpush1.msra.mxu0 0.0
        %579 = vmatprep.subr.mxu0 0.0
        %580 = vmatpush1.msra.mxu0 0.0
        %581 = vmatprep.subr.mxu0 0.0
        %582 = vmatpush1.msra.mxu0 0.0
        %583 = vmatprep.subr.mxu0 0.0
        %584 = vmatpush1.msra.mxu0 0.0
        %585 = vmatprep.subr.mxu0 0.0
        %586 = vmatpush1.msra.mxu0 0.0
        %587 = vmatprep.subr.mxu0 0.0
        %588 = vmatpush1.msra.mxu0 0.0
        %589 = vmatprep.subr.mxu0 0.0
        %590 = vmatpush1.msra.mxu0 0.0
        %591 = vmatprep.subr.mxu0 0.0
        %592 = vmatpush1.msra.mxu0 0.0
        %593 = vmatprep.subr.mxu0 0.0
        %594 = vmatpush1.msra.mxu0 0.0
        %595 = vmatprep.subr.mxu0 0.0
        %596 = vmatpush1.msra.mxu0 0.0
        %597 = vmatprep.subr.mxu0 0.0
        %598 = vmatpush1.msra.mxu0 0.0
        %599 = vmatprep.subr.mxu0 0.0
        %600 = vmatpush1.msra.mxu0 0.0
        %601 = vmatprep.subr.mxu0 0.0
        %602 = vmatpush1.msra.mxu0 0.0
        %603 = vmatprep.subr.mxu0 0.0
        %604 = vmatpush1.msra.mxu0 0.0
        %605 = vmatprep.subr.mxu0 0.0
        %606 = vmatpush1.msra.mxu0 0.0
        %607 = vmatprep.subr.mxu0 0.0
        %608 = vmatpush1.msra.mxu0 0.0
        %609 = vmatprep.subr.mxu0 0.0
        %610 = vmatpush1.msra.mxu0 0.0
        %611 = vmatprep.subr.mxu0 0.0
        %612 = vmatpush1.msra.mxu0 0.0
        %613 = vmatprep.subr.mxu0 0.0
        %614 = vmatpush1.msra.mxu0 0.0
        %615 = vmatprep.subr.mxu0 0.0
        %616 = vmatpush1.msra.mxu0 0.0
        %617 = vmatprep.subr.mxu0 0.0
        %618 = vmatpush1.msra.mxu0 0.0
        %619 = vmatprep.subr.mxu0 0.0
        %620 = vmatpush1.msra.mxu0 0.0
        %621 = vmatprep.mubr.f32.mxu0 0.0
        %622 = vmatmul.mubr.f32.gmra.mrb[0].mxu0 %v534
        %v623 = vpop.f32.mrb[0].mxu0
        %v624 = vadd.f32 %v532, %v623
        %v625 = vpop.f32.mrb[0].mxu0
        %626 = vmatprep.mubr.f32.mxu0 0.0
        %627 = vmatmul.mubr.f32.gmra.mrb[0].mxu0 %v537
        %v628 = vpop.f32.mrb[0].mxu0
        %v629 = vadd.f32 %v532, %v628
        %v630 = vpop.f32.mrb[0].mxu0
        %631 = vmatprep.mubr.f32.mxu0 0.0
        %632 = vmatmul.mubr.f32.gmra.mrb[0].mxu0 %v540
        %v633 = vpop.f32.mrb[0].mxu0
        %v634 = vadd.f32 %v532, %v633
        %v635 = vpop.f32.mrb[0].mxu0
        %636 = vmatprep.mubr.f32.mxu0 0.0
        %637 = vmatmul.mubr.f32.gmra.mrb[0].mxu0 %v543
        %v638 = vpop.f32.mrb[0].mxu0
        %v639 = vadd.f32 %v532, %v638
        %v640 = vpop.f32.mrb[0].mxu0
        %641 = vmatprep.mubr.f32.mxu0 0.0
        %642 = vmatmul.mubr.f32.gmra.mrb[0].mxu0 %v546
        %v643 = vpop.f32.mrb[0].mxu0
        %v644 = vadd.f32 %v532, %v643
        %v645 = vpop.f32.mrb[0].mxu0
        %646 = vmatprep.mubr.f32.mxu0 0.0
        %647 = vmatmul.mubr.f32.gmra.mrb[0].mxu0 %v549
        %v648 = vpop.f32.mrb[0].mxu0
        %v649 = vadd.f32 %v532, %v648
        %v650 = vpop.f32.mrb[0].mxu0
        %651 = vmatprep.mubr.f32.mxu0 0.0
        %652 = vmatmul.mubr.f32.gmra.mrb[0].mxu0 %v552
        %v653 = vpop.f32.mrb[0].mxu0
        %v654 = vadd.f32 %v532, %v653
        %v655 = vpop.f32.mrb[0].mxu0
        %656 = vmatprep.mubr.f32.mxu0 0.0
        %657 = vmatmul.mubr.f32.gmra.mrb[0].mxu0 %v555
        %v658 = vpop.f32.mrb[0].mxu0
        %v659 = vadd.f32 %v532, %v658
        %v660 = vpop.f32.mrb[0].mxu0
        %661 = vdwg.mxu0
        %vm662 = vcmp.gt.f32.partialorder %v624, 0.0
        %vm663 = vcmp.gt.f32.partialorder %v629, 0.0
        %vm664 = vcmp.gt.f32.partialorder %v634, 0.0
        %vm665 = vcmp.gt.f32.partialorder %v639, 0.0
        %vm666 = vcmp.gt.f32.partialorder %v644, 0.0
        %vm667 = vcmp.gt.f32.partialorder %v649, 0.0
        %vm668 = vcmp.gt.f32.partialorder %v654, 0.0
        %vm669 = vcmp.gt.f32.partialorder %v659, 0.0
        %v670 = vmul.f32 %v624, 0.01
        %v671 = vmul.f32 %v629, 0.01
        %v672 = vmul.f32 %v634, 0.01
        %v673 = vmul.f32 %v639, 0.01
        %v674 = vmul.f32 %v644, 0.01
        %v675 = vmul.f32 %v649, 0.01
        %v676 = vmul.f32 %v654, 0.01
        %v677 = vmul.f32 %v659, 0.01
        %v678 = vsel %vm662, %v624, %v670
        %v679 = vsel %vm663, %v629, %v671
        %v680 = vsel %vm664, %v634, %v672
        %v681 = vsel %vm665, %v639, %v673
        %v682 = vsel %vm666, %v644, %v674
        %v683 = vsel %vm667, %v649, %v675
        %v684 = vsel %vm668, %v654, %v676
        %v685 = vsel %vm669, %v659, %v677
        %s686 = scalar_lea.vmem [#allocation8], 32
        %v687 = vld [vmem:[%s686] sm:$0xff]
        %v688 = vld [vmem:[%s686 + $0x8] sm:$0xff]
        %v689 = vld [vmem:[%s686 + $0x10] sm:$0xff]
        %v690 = vld [vmem:[%s686 + $0x18] sm:$0xff]
        %v691 = vlaneseq
        %v692 = vshrl.u32 %v691, 7
        %v693 = vsub.s32 0, %v692
        %v694 = vrot.slane %v361, %v693
        %v696 = vsel %vm371, %v678, 0
        %v699 = vsel %vm371, %v679, 0
        %v702 = vsel %vm371, %v680, 0
        %v705 = vsel %vm371, %v681, 0
        %v708 = vsel %vm371, %v682, 0
        %v711 = vsel %vm371, %v683, 0
        %v714 = vsel %vm371, %v684, 0
        %v717 = vsel %vm371, %v685, 0
        %719 = vmatprep.subr.mxu0 0.0
        %720 = vmatpush1.msra.mxu0 %v687
        %721 = vmatprep.subr.mxu0 0.0
        %722 = vmatpush1.msra.mxu0 %v688
        %723 = vmatprep.subr.mxu0 0.0
        %724 = vmatpush1.msra.mxu0 %v689
        %725 = vmatprep.subr.mxu0 0.0
        %726 = vmatpush1.msra.mxu0 %v690
        %727 = vmatprep.subr.mxu0 0.0
        %728 = vmatpush1.msra.mxu0 0.0
        %729 = vmatprep.subr.mxu0 0.0
        %730 = vmatpush1.msra.mxu0 0.0
        %731 = vmatprep.subr.mxu0 0.0
        %732 = vmatpush1.msra.mxu0 0.0
        %733 = vmatprep.subr.mxu0 0.0
        %734 = vmatpush1.msra.mxu0 0.0
        %735 = vmatprep.subr.mxu0 0.0
        %736 = vmatpush1.msra.mxu0 0.0
        %737 = vmatprep.subr.mxu0 0.0
        %738 = vmatpush1.msra.mxu0 0.0
        %739 = vmatprep.subr.mxu0 0.0
        %740 = vmatpush1.msra.mxu0 0.0
        %741 = vmatprep.subr.mxu0 0.0
        %742 = vmatpush1.msra.mxu0 0.0
        %743 = vmatprep.subr.mxu0 0.0
        %744 = vmatpush1.msra.mxu0 0.0
        %745 = vmatprep.subr.mxu0 0.0
        %746 = vmatpush1.msra.mxu0 0.0
        %747 = vmatprep.subr.mxu0 0.0
        %748 = vmatpush1.msra.mxu0 0.0
        %749 = vmatprep.subr.mxu0 0.0
        %750 = vmatpush1.msra.mxu0 0.0
        %751 = vmatprep.subr.mxu0 0.0
        %752 = vmatpush1.msra.mxu0 0.0
        %753 = vmatprep.subr.mxu0 0.0
        %754 = vmatpush1.msra.mxu0 0.0
        %755 = vmatprep.subr.mxu0 0.0
        %756 = vmatpush1.msra.mxu0 0.0
        %757 = vmatprep.subr.mxu0 0.0
        %758 = vmatpush1.msra.mxu0 0.0
        %759 = vmatprep.subr.mxu0 0.0
        %760 = vmatpush1.msra.mxu0 0.0
        %761 = vmatprep.subr.mxu0 0.0
        %762 = vmatpush1.msra.mxu0 0.0
        %763 = vmatprep.subr.mxu0 0.0
        %764 = vmatpush1.msra.mxu0 0.0
        %765 = vmatprep.subr.mxu0 0.0
        %766 = vmatpush1.msra.mxu0 0.0
        %767 = vmatprep.subr.mxu0 0.0
        %768 = vmatpush1.msra.mxu0 0.0
        %769 = vmatprep.subr.mxu0 0.0
        %770 = vmatpush1.msra.mxu0 0.0
        %771 = vmatprep.subr.mxu0 0.0
        %772 = vmatpush1.msra.mxu0 0.0
        %773 = vmatprep.subr.mxu0 0.0
        %774 = vmatpush1.msra.mxu0 0.0
        %775 = vmatprep.subr.mxu0 0.0
        %776 = vmatpush1.msra.mxu0 0.0
        %777 = vmatprep.subr.mxu0 0.0
        %778 = vmatpush1.msra.mxu0 0.0
        %779 = vmatprep.subr.mxu0 0.0
        %780 = vmatpush1.msra.mxu0 0.0
        %781 = vmatprep.subr.mxu0 0.0
        %782 = vmatpush1.msra.mxu0 0.0
        %783 = vmatprep.mubr.f32.mxu0 0.0
        %784 = vmatmul.mubr.f32.gmra.mrb[0].mxu0 %v696
        %v785 = vpop.f32.mrb[0].mxu0
        %v786 = vadd.f32 %v694, %v785
        %v787 = vpop.f32.mrb[0].mxu0
        %788 = vmatprep.mubr.f32.mxu0 0.0
        %789 = vmatmul.mubr.f32.gmra.mrb[0].mxu0 %v699
        %v790 = vpop.f32.mrb[0].mxu0
        %v791 = vadd.f32 %v694, %v790
        %v792 = vpop.f32.mrb[0].mxu0
        %793 = vmatprep.mubr.f32.mxu0 0.0
        %794 = vmatmul.mubr.f32.gmra.mrb[0].mxu0 %v702
        %v795 = vpop.f32.mrb[0].mxu0
        %v796 = vadd.f32 %v694, %v795
        %v797 = vpop.f32.mrb[0].mxu0
        %798 = vmatprep.mubr.f32.mxu0 0.0
        %799 = vmatmul.mubr.f32.gmra.mrb[0].mxu0 %v705
        %v800 = vpop.f32.mrb[0].mxu0
        %v801 = vadd.f32 %v694, %v800
        %v802 = vpop.f32.mrb[0].mxu0
        %803 = vmatprep.mubr.f32.mxu0 0.0
        %804 = vmatmul.mubr.f32.gmra.mrb[0].mxu0 %v708
        %v805 = vpop.f32.mrb[0].mxu0
        %v806 = vadd.f32 %v694, %v805
        %v807 = vpop.f32.mrb[0].mxu0
        %808 = vmatprep.mubr.f32.mxu0 0.0
        %809 = vmatmul.mubr.f32.gmra.mrb[0].mxu0 %v711
        %v810 = vpop.f32.mrb[0].mxu0
        %v811 = vadd.f32 %v694, %v810
        %v812 = vpop.f32.mrb[0].mxu0
        %813 = vmatprep.mubr.f32.mxu0 0.0
        %814 = vmatmul.mubr.f32.gmra.mrb[0].mxu0 %v714
        %v815 = vpop.f32.mrb[0].mxu0
        %v816 = vadd.f32 %v694, %v815
        %v817 = vpop.f32.mrb[0].mxu0
        %818 = vmatprep.mubr.f32.mxu0 0.0
        %819 = vmatmul.mubr.f32.gmra.mrb[0].mxu0 %v717
        %v820 = vpop.f32.mrb[0].mxu0
        %v821 = vadd.f32 %v694, %v820
        %v822 = vpop.f32.mrb[0].mxu0
        %823 = vdwg.mxu0
        %vm824 = vcmp.gt.f32.partialorder %v786, 0.0
        %vm825 = vcmp.gt.f32.partialorder %v791, 0.0
        %vm826 = vcmp.gt.f32.partialorder %v796, 0.0
        %vm827 = vcmp.gt.f32.partialorder %v801, 0.0
        %vm828 = vcmp.gt.f32.partialorder %v806, 0.0
        %vm829 = vcmp.gt.f32.partialorder %v811, 0.0
        %vm830 = vcmp.gt.f32.partialorder %v816, 0.0
        %vm831 = vcmp.gt.f32.partialorder %v821, 0.0
        %v832 = vmul.f32 %v786, 0.01
        %v833 = vmul.f32 %v791, 0.01
        %v834 = vmul.f32 %v796, 0.01
        %v835 = vmul.f32 %v801, 0.01
        %v836 = vmul.f32 %v806, 0.01
        %v837 = vmul.f32 %v811, 0.01
        %v838 = vmul.f32 %v816, 0.01
        %v839 = vmul.f32 %v821, 0.01
        %v840 = vsel %vm824, %v786, %v832
        %v841 = vsel %vm825, %v791, %v833
        %v842 = vsel %vm826, %v796, %v834
        %v843 = vsel %vm827, %v801, %v835
        %v844 = vsel %vm828, %v806, %v836
        %v845 = vsel %vm829, %v811, %v837
        %v846 = vsel %vm830, %v816, %v838
        %v847 = vsel %vm831, %v821, %v839
        %v848 = vsel %vm371, %v840, 0.0
        %v849 = vrot.slane %v848, 4
        %v850 = vadd.f32 %v848, %v849
        %v851 = vrot.slane %v850, 2
        %v852 = vadd.f32 %v850, %v851
        %v853 = vrot.slane %v852, 1
        %v854 = vadd.f32 %v852, %v853
        %v855 = vsel %vm371, %v841, 0.0
        %v856 = vrot.slane %v855, 4
        %v857 = vadd.f32 %v855, %v856
        %v858 = vrot.slane %v857, 2
        %v859 = vadd.f32 %v857, %v858
        %v860 = vrot.slane %v859, 1
        %v861 = vadd.f32 %v859, %v860
        %v862 = vsel %vm371, %v842, 0.0
        %v863 = vrot.slane %v862, 4
        %v864 = vadd.f32 %v862, %v863
        %v865 = vrot.slane %v864, 2
        %v866 = vadd.f32 %v864, %v865
        %v867 = vrot.slane %v866, 1
        %v868 = vadd.f32 %v866, %v867
        %v869 = vsel %vm371, %v843, 0.0
        %v870 = vrot.slane %v869, 4
        %v871 = vadd.f32 %v869, %v870
        %v872 = vrot.slane %v871, 2
        %v873 = vadd.f32 %v871, %v872
        %v874 = vrot.slane %v873, 1
        %v875 = vadd.f32 %v873, %v874
        %v876 = vsel %vm371, %v844, 0.0
        %v877 = vrot.slane %v876, 4
        %v878 = vadd.f32 %v876, %v877
        %v879 = vrot.slane %v878, 2
        %v880 = vadd.f32 %v878, %v879
        %v881 = vrot.slane %v880, 1
        %v882 = vadd.f32 %v880, %v881
        %v883 = vsel %vm371, %v845, 0.0
        %v884 = vrot.slane %v883, 4
        %v885 = vadd.f32 %v883, %v884
        %v886 = vrot.slane %v885, 2
        %v887 = vadd.f32 %v885, %v886
        %v888 = vrot.slane %v887, 1
        %v889 = vadd.f32 %v887, %v888
        %v890 = vsel %vm371, %v846, 0.0
        %v891 = vrot.slane %v890, 4
        %v892 = vadd.f32 %v890, %v891
        %v893 = vrot.slane %v892, 2
        %v894 = vadd.f32 %v892, %v893
        %v895 = vrot.slane %v894, 1
        %v896 = vadd.f32 %v894, %v895
        %v897 = vsel %vm371, %v847, 0.0
        %v898 = vrot.slane %v897, 4
        %v899 = vadd.f32 %v897, %v898
        %v900 = vrot.slane %v899, 2
        %v901 = vadd.f32 %v899, %v900
        %v902 = vrot.slane %v901, 1
        %v903 = vadd.f32 %v901, %v902
        %v904 = vrcp.pop 8.0
        %v905 = vmul.f32 %v854, %v904
        %v906 = vmul.f32 %v861, %v904
        %v907 = vmul.f32 %v868, %v904
        %v908 = vmul.f32 %v875, %v904
        %v909 = vmul.f32 %v882, %v904
        %v910 = vmul.f32 %v889, %v904
        %v911 = vmul.f32 %v896, %v904
        %v912 = vmul.f32 %v903, %v904
        %v913 = vld [vmem:[%s304] sm:$0xff]
        %v915 = vrot.slane %v913, 1
        %v916 = vrot.slane %v913, 2
        %v917 = vrot.slane %v913, 3
        %v918 = vrot.slane %v913, 4
        %v919 = vrot.slane %v913, 5
        %v920 = vrot.slane %v913, 6
        %v921 = vrot.slane %v913, 7
        %v930 = vadd.f32 %v905, %v913
        %v931 = vadd.f32 %v906, %v915
        %v932 = vadd.f32 %v907, %v916
        %v933 = vadd.f32 %v908, %v917
        %v934 = vadd.f32 %v909, %v918
        %v935 = vadd.f32 %v910, %v919
        %v936 = vadd.f32 %v911, %v920
        %v937 = vadd.f32 %v912, %v921
        %s938 = scalar_lea.vmem [#allocation8], 64
        %v939 = vld [vmem:[%s938] sm:$0xff]
        %v940 = vld [vmem:[%s938 + $0x8] sm:$0xff]
        %v941 = vld [vmem:[%s938 + $0x10] sm:$0xff]
        %v942 = vld [vmem:[%s938 + $0x18] sm:$0xff]
        %v943 = vlaneseq
        %v944 = vshrl.u32 %v943, 7
        %v945 = vsub.s32 0, %v944
        %v946 = vrot.slane %v362, %v945
        %v955 = vrot.slane %v931, 7
        %vm956 = vcmask 1041409
        %v957 = vsel %vm956, %v955, %v930
        %v958 = vrot.slane %v932, 6
        %vm959 = vcmask 1042434
        %v960 = vsel %vm959, %v958, %v957
        %v961 = vrot.slane %v933, 5
        %vm962 = vcmask 1043459
        %v963 = vsel %vm962, %v961, %v960
        %v964 = vrot.slane %v934, 4
        %vm965 = vcmask 1044484
        %v966 = vsel %vm965, %v964, %v963
        %v967 = vrot.slane %v935, 3
        %vm968 = vcmask 1045509
        %v969 = vsel %vm968, %v967, %v966
        %v970 = vrot.slane %v936, 2
        %vm971 = vcmask 1046534
        %v972 = vsel %vm971, %v970, %v969
        %v973 = vrot.slane %v937, 1
        %vm974 = vcmask 1047559
        %v975 = vsel %vm974, %v973, %v972
        %v976 = vsel %vm371, %v975, 0
        %978 = vmatprep.subr.mxu0 0.0
        %979 = vmatpush1.msra.mxu0 %v939
        %980 = vmatprep.subr.mxu0 0.0
        %981 = vmatpush1.msra.mxu0 %v940
        %982 = vmatprep.subr.mxu0 0.0
        %983 = vmatpush1.msra.mxu0 %v941
        %984 = vmatprep.subr.mxu0 0.0
        %985 = vmatpush1.msra.mxu0 %v942
        %986 = vmatprep.subr.mxu0 0.0
        %987 = vmatpush1.msra.mxu0 0.0
        %988 = vmatprep.subr.mxu0 0.0
        %989 = vmatpush1.msra.mxu0 0.0
        %990 = vmatprep.subr.mxu0 0.0
        %991 = vmatpush1.msra.mxu0 0.0
        %992 = vmatprep.subr.mxu0 0.0
        %993 = vmatpush1.msra.mxu0 0.0
        %994 = vmatprep.subr.mxu0 0.0
        %995 = vmatpush1.msra.mxu0 0.0
        %996 = vmatprep.subr.mxu0 0.0
        %997 = vmatpush1.msra.mxu0 0.0
        %998 = vmatprep.subr.mxu0 0.0
        %999 = vmatpush1.msra.mxu0 0.0
        %1000 = vmatprep.subr.mxu0 0.0
        %1001 = vmatpush1.msra.mxu0 0.0
        %1002 = vmatprep.subr.mxu0 0.0
        %1003 = vmatpush1.msra.mxu0 0.0
        %1004 = vmatprep.subr.mxu0 0.0
        %1005 = vmatpush1.msra.mxu0 0.0
        %1006 = vmatprep.subr.mxu0 0.0
        %1007 = vmatpush1.msra.mxu0 0.0
        %1008 = vmatprep.subr.mxu0 0.0
        %1009 = vmatpush1.msra.mxu0 0.0
        %1010 = vmatprep.subr.mxu0 0.0
        %1011 = vmatpush1.msra.mxu0 0.0
        %1012 = vmatprep.subr.mxu0 0.0
        %1013 = vmatpush1.msra.mxu0 0.0
        %1014 = vmatprep.subr.mxu0 0.0
        %1015 = vmatpush1.msra.mxu0 0.0
        %1016 = vmatprep.subr.mxu0 0.0
        %1017 = vmatpush1.msra.mxu0 0.0
        %1018 = vmatprep.subr.mxu0 0.0
        %1019 = vmatpush1.msra.mxu0 0.0
        %1020 = vmatprep.subr.mxu0 0.0
        %1021 = vmatpush1.msra.mxu0 0.0
        %1022 = vmatprep.subr.mxu0 0.0
        %1023 = vmatpush1.msra.mxu0 0.0
        %1024 = vmatprep.subr.mxu0 0.0
        %1025 = vmatpush1.msra.mxu0 0.0
        %1026 = vmatprep.subr.mxu0 0.0
        %1027 = vmatpush1.msra.mxu0 0.0
        %1028 = vmatprep.subr.mxu0 0.0
        %1029 = vmatpush1.msra.mxu0 0.0
        %1030 = vmatprep.subr.mxu0 0.0
        %1031 = vmatpush1.msra.mxu0 0.0
        %1032 = vmatprep.subr.mxu0 0.0
        %1033 = vmatpush1.msra.mxu0 0.0
        %1034 = vmatprep.subr.mxu0 0.0
        %1035 = vmatpush1.msra.mxu0 0.0
        %1036 = vmatprep.subr.mxu0 0.0
        %1037 = vmatpush1.msra.mxu0 0.0
        %1038 = vmatprep.subr.mxu0 0.0
        %1039 = vmatpush1.msra.mxu0 0.0
        %1040 = vmatprep.subr.mxu0 0.0
        %1041 = vmatpush1.msra.mxu0 0.0
        %1042 = vmatprep.mubr.f32.mxu0 0.0
        %1043 = vmatmul.mubr.f32.gmra.mrb[0].mxu0 %v976
        %v1044 = vpop.f32.mrb[0].mxu0
        %v1045 = vadd.f32 %v946, %v1044
        %v1046 = vpop.f32.mrb[0].mxu0
        %1047 = vdwg.mxu0
        %vm1048 = vcmp.gt.f32.partialorder %v1045, 0.0
        %v1049 = vmul.f32 %v1045, 0.01
        %v1050 = vsel %vm1048, %v1045, %v1049
        %v1051 = vld [vmem:[#allocation10] sm:$0xff]
        %v1052 = vld [vmem:[#allocation10 + $0x8] sm:$0xff]
        %v1053 = vld [vmem:[#allocation10 + $0x10] sm:$0xff]
        %v1054 = vld [vmem:[#allocation10 + $0x18] sm:$0xff]
        %v1056 = vsel %vm371, %v1050, 0
        %1058 = vmatprep.subr.mxu0 0.0
        %1059 = vmatpush1.msra.mxu0 %v1051
        %1060 = vmatprep.subr.mxu0 0.0
        %1061 = vmatpush1.msra.mxu0 %v1052
        %1062 = vmatprep.subr.mxu0 0.0
        %1063 = vmatpush1.msra.mxu0 %v1053
        %1064 = vmatprep.subr.mxu0 0.0
        %1065 = vmatpush1.msra.mxu0 %v1054
        %1066 = vmatprep.subr.mxu0 0.0
        %1067 = vmatpush1.msra.mxu0 0.0
        %1068 = vmatprep.subr.mxu0 0.0
        %1069 = vmatpush1.msra.mxu0 0.0
        %1070 = vmatprep.subr.mxu0 0.0
        %1071 = vmatpush1.msra.mxu0 0.0
        %1072 = vmatprep.subr.mxu0 0.0
        %1073 = vmatpush1.msra.mxu0 0.0
        %1074 = vmatprep.subr.mxu0 0.0
        %1075 = vmatpush1.msra.mxu0 0.0
        %1076 = vmatprep.subr.mxu0 0.0
        %1077 = vmatpush1.msra.mxu0 0.0
        %1078 = vmatprep.subr.mxu0 0.0
        %1079 = vmatpush1.msra.mxu0 0.0
        %1080 = vmatprep.subr.mxu0 0.0
        %1081 = vmatpush1.msra.mxu0 0.0
        %1082 = vmatprep.subr.mxu0 0.0
        %1083 = vmatpush1.msra.mxu0 0.0
        %1084 = vmatprep.subr.mxu0 0.0
        %1085 = vmatpush1.msra.mxu0 0.0
        %1086 = vmatprep.subr.mxu0 0.0
        %1087 = vmatpush1.msra.mxu0 0.0
        %1088 = vmatprep.subr.mxu0 0.0
        %1089 = vmatpush1.msra.mxu0 0.0
        %1090 = vmatprep.subr.mxu0 0.0
        %1091 = vmatpush1.msra.mxu0 0.0
        %1092 = vmatprep.subr.mxu0 0.0
        %1093 = vmatpush1.msra.mxu0 0.0
        %1094 = vmatprep.subr.mxu0 0.0
        %1095 = vmatpush1.msra.mxu0 0.0
        %1096 = vmatprep.subr.mxu0 0.0
        %1097 = vmatpush1.msra.mxu0 0.0
        %1098 = vmatprep.subr.mxu0 0.0
        %1099 = vmatpush1.msra.mxu0 0.0
        %1100 = vmatprep.subr.mxu0 0.0
        %1101 = vmatpush1.msra.mxu0 0.0
        %1102 = vmatprep.subr.mxu0 0.0
        %1103 = vmatpush1.msra.mxu0 0.0
        %1104 = vmatprep.subr.mxu0 0.0
        %1105 = vmatpush1.msra.mxu0 0.0
        %1106 = vmatprep.subr.mxu0 0.0
        %1107 = vmatpush1.msra.mxu0 0.0
        %1108 = vmatprep.subr.mxu0 0.0
        %1109 = vmatpush1.msra.mxu0 0.0
        %1110 = vmatprep.subr.mxu0 0.0
        %1111 = vmatpush1.msra.mxu0 0.0
        %1112 = vmatprep.subr.mxu0 0.0
        %1113 = vmatpush1.msra.mxu0 0.0
        %1114 = vmatprep.subr.mxu0 0.0
        %1115 = vmatpush1.msra.mxu0 0.0
        %1116 = vmatprep.subr.mxu0 0.0
        %1117 = vmatpush1.msra.mxu0 0.0
        %1118 = vmatprep.subr.mxu0 0.0
        %1119 = vmatpush1.msra.mxu0 0.0
        %1120 = vmatprep.subr.mxu0 0.0
        %1121 = vmatpush1.msra.mxu0 0.0
        %1122 = vmatprep.mubr.f32.mxu0 0.0
        %1123 = vmatmul.mubr.f32.gmra.mrb[0].mxu0 %v1056
        %v1124 = vpop.f32.mrb[0].mxu0
        %v1125 = vadd.f32 0.0, %v1124
        %v1126 = vpop.f32.mrb[0].mxu0
        %1127 = vdwg.mxu0
        %1128 = vst [vmem:[%s349] sm:$0xff] %v1125
        %s1129 = sand.u32 %s171, 1
        %s1130 = scalar_lea.sflag [#allocation4], %s1129
        %s1131 = sand.u32 %s171, 1
        %s1132 = smul.addr %s1131, 8
        %s1133 = scalar_lea.vmem [#allocation11], %s1132
        // Predicated region
        $region65: #{tpu_custom_call.1} parent=43 // pred_check
          %p1134 = pneg %p181
        $region66: #{tpu_custom_call.1} parent=43 // pred_check_branch
          %1136 = sbr.rel (%p1134) target = $region68
        $region67: #{tpu_custom_call.1} parent=43 // pred_region
          %s1138 = ssub.s32 128, 128
          %1139 = vsyncadd %s1130, %s1138
          %s1140 = smul.addr %s27, 128
          %s1141 = scalar_lea.hbm %s6, %s1140
          %s1143 = sshll.u32 %s1133, 4
          %s1144 = int_to_ptr.vmem [resolvable:$true] %s1143
          %1146 = dma.vmem_to_hbm [thread:$0]  %s1144, 128, %s1141, %s1130
        $region68: #{tpu_custom_call.1} parent=43 // pred_fallthru
          _
      $region44: #{tpu_custom_call.1} parent=5 // pred_fallthru
        _
      %p1147 = scmp.le.s32.totalorder 2, %s22
      // Predicated region
      $region69: #{tpu_custom_call.1} parent=5 // pred_check
        %p1148 = pneg %p1147
      $region70: #{tpu_custom_call.1} parent=5 // pred_check_branch
        %1150 = sbr.rel (%p1148) target = $region72
      $region71: #{tpu_custom_call.1} parent=5 // pred_region
        %s1151 = ssub.s32 %s22, 2
        // Predicated region
        $region73: #{tpu_custom_call.1} parent=71 // pred_check
          %p1152 = pneg %p187
        $region74: #{tpu_custom_call.1} parent=71 // pred_check_branch
          %1154 = sbr.rel (%p1152) target = $region76
        $region75: #{tpu_custom_call.1} parent=71 // pred_region
          %s1155 = sand.u32 %s172, 1
          %s1156 = scalar_lea.sflag [#allocation4], %s1155
          %s1157 = sand.u32 %s172, 1
          %s1158 = smul.addr %s1157, 8
          %s1159 = scalar_lea.vmem [#allocation11], %s1158
          %1160 = dma.done %s1156, 128
        $region76: #{tpu_custom_call.1} parent=71 // pred_fallthru
          _
      $region72: #{tpu_custom_call.1} parent=5 // pred_fallthru
        _
    $region6: #{tpu_custom_call.1} parent=1 // loop_footer
      %s26 = sadd.s32 1, %s22
    $region7: #{tpu_custom_call.1} parent=1 // loop_footer_branch
      %21 = sbr.rel target = $region3
    $region8: #{tpu_custom_call.1} parent=1 // loop_exit
      _
    %1161 = vsyncpa [#allocation3], 1
    %s1162 = scalar_lea.sflag [#allocation3], 1
    %1163 = vsyncpa %s1162, 1
    %1164 = vsyncpa [#allocation6], 1
    %s1165 = scalar_lea.sflag [#allocation6], 1
    %1166 = vsyncpa %s1165, 1
    %1167 = vsyncpa [#allocation9], 1
    %1168 = vsyncpa [#allocation4], 1
    %s1169 = scalar_lea.sflag [#allocation4], 1
    %1170 = vsyncpa %s1169, 1

</llo_original>
